<compile_context>
chip_gen: v6e
topology: v6e:2x2x1
jax: 0.10.0
libtpu: 0.0.40
codegen_flags: <defaults>
</compile_context>

<pallas_src>
import functools

import numpy as np
import jax
import jax.numpy as jnp
from jax.experimental import pallas as pl
from jax.experimental.pallas import tpu as pltpu

# Fixed (non-learned) Fourier coefficients from the module's __init__ (N = 10).
N_TERMS = 10
assert N_TERMS >= 4  # Clenshaw peeling below assumes this.
_W = [np.float32(((-1.0) ** (n + 1)) / (np.pi * (n + 1))) for n in range(N_TERMS)]
_TWO_PI = np.float32(2.0 * np.pi)
_MIB = 1024 * 1024

# Generation-aware VMEM budget (v5e/v6e: 128 MiB, v7x: 64 MiB).
try:
    _VMEM_CAP = int(pltpu.get_tpu_info().vmem_capacity_bytes)
except Exception:  # conservative fallback (v7x-sized)
    _VMEM_CAP = 64 * _MIB

VMEM_LIMIT = max(32 * _MIB, min(_VMEM_CAP - 32 * _MIB, 100 * _MIB))
# Fused path keeps ~8-10 full-size f32 intermediates live -> stay well inside budget.
FUSED_MAX_BYTES = VMEM_LIMIT // 12
# Tiled-path block budget: 4 MiB on v5e/v6e, 2 MiB on v7x.
TILE_BYTES = 4 * _MIB if _VMEM_CAP >= 100 * _MIB else 2 * _MIB


# --------------------------- fourier helper -------------------------------- #

def _fourier_round(t):
    """t + sum_{m=1}^{N} w_m * sin(2*pi*m*t) via Clenshaw's downward recurrence.

    Only 1 sin + 1 cos on the EUP; ~3 VALU ops per term on the VPU.
    b_{N+1} = b_{N+2} = 0;  b_m = w_m + 2cos(theta)*b_{m+1} - b_{m+2};
    result = b_1 * sin(theta).
    """
    theta = t * _TWO_PI
    c2 = 2.0 * jnp.cos(theta)
    s1 = jnp.sin(theta)
    # First two steps peeled (b_N is the constant w_N, b_{N+1}=b_{N+2}=0).
    b_prev = _W[N_TERMS - 2] + c2 * _W[N_TERMS - 1]            # b_{N-1}
    b_cur = _W[N_TERMS - 3] + c2 * b_prev - _W[N_TERMS - 1]    # b_{N-2}
    for m in range(N_TERMS - 3, 0, -1):                        # b_{N-3} .. b_1
        b_cur, b_prev = _W[m - 1] + c2 * b_cur - b_prev, b_cur
    return t + s1 * b_cur


# ------------------------------- kernels ----------------------------------- #

def _fused_kernel(x_ref, o_ref):
    """Whole image resident in VMEM: min/max -> fourier -> min/max -> rescale."""
    x = x_ref[...]
    x_min = jnp.min(x)
    x_max = jnp.max(x)
    # Affine fold: scalar scale/bias once, then one mul + one add per element.
    sx = 255.0 / (x_max - x_min)
    t = jnp.clip(x * sx + (-x_min * sx), 0.0, 255.0)
    y = _fourier_round(t)
    y_min = jnp.min(y)
    y_max = jnp.max(y)
    sy = (x_max - x_min) / (y_max - y_min)
    o_ref[...] = y * sy + (x_min - y_min * sy)


def _make_fourier_pass_kernel(block_rows, total_rows):
    """Pass 1, two-sweep grid (sweep, block):
       sweep 0: accumulate x min/max (scalars, in SMEM mm_ref).
       sweep 1: normalize/clamp/fourier, store y, accumulate y min/max.
       mm_ref (SMEM, f32[4]) = [x_min, x_max, y_min, y_max]."""

    def kernel(x_ref, y_ref, mm_ref):
        sweep = pl.program_id(0)
        blk = pl.program_id(1)
        # Valid rows in this block (< block_rows only for a ragged last block;
        # OOB rows of a partial block contain unspecified data).
        valid_rows = total_rows - blk * block_rows

        def block_min_max(v):
            # Row-wise XLU reduce, then mask possibly-garbage tail rows before
            # the final scalar reduce (cheap: per-row, not per-element).
            row_min = jnp.min(v, axis=1, keepdims=True)
            row_max = jnp.max(v, axis=1, keepdims=True)
            rid = jax.lax.broadcasted_iota(jnp.int32, row_min.shape, 0)
            ok = rid < valid_rows
            return (jnp.min(jnp.where(ok, row_min, jnp.inf)),
                    jnp.max(jnp.where(ok, row_max, -jnp.inf)))

        @pl.when(jnp.logical_and(sweep == 0, blk == 0))
        def _():
            mm_ref[0] = np.float32(np.inf)
            mm_ref[1] = np.float32(-np.inf)
            mm_ref[2] = np.float32(np.inf)
            mm_ref[3] = np.float32(-np.inf)

        @pl.when(sweep == 0)
        def _():
            x = x_ref[...]
            bmin, bmax = block_min_max(x)
            mm_ref[0] = jnp.minimum(mm_ref[0], bmin)
            mm_ref[1] = jnp.maximum(mm_ref[1], bmax)
            # Defensive: keep the resident y window initialized.  Its block
            # index is pinned at 0 for all of sweep 0 (see y_spec), so nothing
            # is flushed to HBM here; sweep 1 rewrites every block before its
            # flush.  This write only makes that invariant robust.
            y_ref[...] = x

        @pl.when(sweep == 1)
        def _():
            x_min = mm_ref[0]
            x_max = mm_ref[1]
            sx = 255.0 / (x_max - x_min)      # scalar, once per block
            bx = -x_min * sx
            t = jnp.clip(x_ref[...] * sx + bx, 0.0, 255.0)
            y = _fourier_round(t)
            y_ref[...] = y
            bmin, bmax = block_min_max(y)
            mm_ref[2] = jnp.minimum(mm_ref[2], bmin)
            mm_ref[3] = jnp.maximum(mm_ref[3], bmax)

    return kernel


def _rescale_kernel(mm_ref, y_ref, o_ref):
    """transform(y, (x_min, x_max)) — one mul + one add per element, in place."""
    x_min = mm_ref[0]
    x_max = mm_ref[1]
    y_min = mm_ref[2]
    y_max = mm_ref[3]
    s = (x_max - x_min) / (y_max - y_min)
    o_ref[...] = y_ref[...] * s + (x_min - y_min * s)


# ------------------------------- wrappers ----------------------------------- #

def _fused_path(x):
    n = x.size
    cols = None
    for c in (1024, 512, 256, 128):
        if n % c == 0:
            cols = c
            break
    pad = 0
    if cols is not None:
        x2 = x.reshape(n // cols, cols)                   # free, lane-dense
    elif x.ndim >= 2 and x.shape[-1] % 128 == 0:
        x2 = x.reshape(-1, x.shape[-1])                   # free, lane-dense
    else:
        # Pad with a duplicate of an existing element (global min/max of both
        # x and y are unaffected) so the output slab stays lane-dense.
        padded = ((n + 127) // 128) * 128
        pad = padded - n
        flat = x.reshape(-1)
        flat = jnp.concatenate([flat, jnp.broadcast_to(flat[0], (pad,))])
        x2 = flat.reshape(-1, 128)

    out2 = pl.pallas_call(
        _fused_kernel,
        out_shape=jax.ShapeDtypeStruct(x2.shape, jnp.float32),
        compiler_params=pltpu.CompilerParams(vmem_limit_bytes=VMEM_LIMIT),
    )(x2)
    if pad:
        out2 = out2.reshape(-1)[:n]
    return out2.reshape(x.shape)


def _pick_block_rows(rows, cols, tile_bytes):
    target = max(8, tile_bytes // (cols * 4))
    if target >= rows:
        return rows                      # single (full-extent) block
    return max(8, (target // 8) * 8)     # multiple of 8 rows


def _tiled_path(x, tile_bytes):
    orig_shape = x.shape
    n = x.size
    tile_bytes = TILE_BYTES if tile_bytes is None else tile_bytes

    # Free (no-copy) 2D views; a padding copy only as a last resort.
    pad = 0
    cols = None
    for c in (1024, 512, 256, 128):
        if n % c == 0:
            cols = c
            break
    if cols is not None:
        x2d = x.reshape(n // cols, cols)                  # free, lane-dense
    elif x.ndim >= 2 and x.shape[-1] <= 8192:
        cols = int(x.shape[-1])
        x2d = x.reshape(-1, cols)                         # free, natural width
    else:
        # TODO(synk): in-kernel column masking would avoid this copy too; only
        # hit for 1-D / very-wide inputs whose size is not a multiple of 128.
        cols = 1024
        padded = ((n + cols - 1) // cols) * cols
        pad = padded - n
        flat = x.reshape(-1)
        flat = jnp.concatenate([flat, jnp.broadcast_to(flat[0], (pad,))])
        x2d = flat.reshape(-1, cols)

    rows = int(x2d.shape[0])
    br = _pick_block_rows(rows, cols, tile_bytes)
    nblk = -(-rows // br)

    data_spec = pl.BlockSpec((br, cols), lambda s, b: (b, 0))
    # During sweep 0 the y block index stays pinned at 0, so no HBM writeback
    # happens; sweep 1 writes every block exactly once before it is flushed.
    y_spec = pl.BlockSpec((br, cols), lambda s, b: (b * s, 0))
    smem_spec = pl.BlockSpec(memory_space=pltpu.MemorySpace.SMEM)

    # Pass 1 (2-sweep): x min/max, then fourier + y min/max.
    y2d, mm = pl.pallas_call(
        _make_fourier_pass_kernel(br, rows),
        out_shape=(
            jax.ShapeDtypeStruct(x2d.shape, jnp.float32),
            jax.ShapeDtypeStruct((4,), jnp.float32),
        ),
        grid=(2, nblk),
        in_specs=[data_spec],
        out_specs=(y_spec, smem_spec),
        compiler_params=pltpu.CompilerParams(
            dimension_semantics=("arbitrary", "arbitrary"),
            vmem_limit_bytes=VMEM_LIMIT,
        ),
    )(x2d)

    # Pass 2: rescale y back to the original (min, max) range, in place over y.
    blk_spec = pl.BlockSpec((br, cols), lambda b: (b, 0))
    out2d = pl.pallas_call(
        _rescale_kernel,
        out_shape=jax.ShapeDtypeStruct(x2d.shape, jnp.float32),
        grid=(nblk,),
        in_specs=[smem_spec, blk_spec],
        out_specs=blk_spec,
        input_output_aliases={1: 0},
        compiler_params=pltpu.CompilerParams(
            dimension_semantics=("parallel",),
            vmem_limit_bytes=VMEM_LIMIT,
        ),
    )(mm, y2d)

    if pad:
        out2d = out2d.reshape(-1)[:n]
    return out2d.reshape(orig_shape)


@functools.partial(jax.jit, static_argnames=("force_tiled", "tile_bytes"))
def _quantize(x, *, force_tiled=False, tile_bytes=None):
    x = x.astype(jnp.float32)
    nbytes = x.size * 4
    if (not force_tiled) and nbytes <= FUSED_MAX_BYTES:
        return _fused_path(x)
    return _tiled_path(x, tile_bytes)


def quantization_forward(noised_and_cover, *, force_tiled=False, tile_bytes=None):
    noised, cover = noised_and_cover[0], noised_and_cover[1]
    out = _quantize(noised, force_tiled=force_tiled, tile_bytes=tile_bytes)
    return [out, cover]


# ------------------------------ reference ----------------------------------- #

def _reference(x):
    x = x.astype(jnp.float32)
    t = (x - x.min()) / (x.max() - x.min()) * 255.0
    t = jnp.clip(t, 0.0, 255.0)
    z = jnp.zeros_like(t)
    for n in range(N_TERMS):
        z = z + _W[n] * jnp.sin(t * np.float32(2.0 * np.pi * (n + 1)))
    y = t + z
    return (y - y.min()) / (y.max() - y.min()) * (x.max() - x.min()) + x.min()


if __name__ == "__main__":
    key = jax.random.PRNGKey(0)
    k1, k2, k3, k4 = jax.random.split(key, 4)

    # 1) Small input -> fused single-kernel path (module-sized example).
    noised = jax.random.normal(k1, (2, 4, 16, 16), dtype=jnp.float32)
    cover = jax.random.normal(k2, (2, 4, 16, 16), dtype=jnp.float32)
    out, cover_out = quantization_forward([noised, cover])
    out = jax.block_until_ready(out)
    ref = jax.block_until_ready(_reference(noised))
    assert out.shape == noised.shape and out.dtype == jnp.float32
    assert np.allclose(np.asarray(out), np.asarray(ref), atol=5e-3, rtol=1e-3)
    assert np.array_equal(np.asarray(cover_out), np.asarray(cover))

    # 2) Non-128-divisible shape on the tiled path with a small forced tile:
    #    exercises the no-copy (rows, 250) view, multi-block SMEM min/max
    #    accumulation and the ragged (masked) last row-block.
    big = jax.random.normal(k3, (2, 3, 250, 250), dtype=jnp.float32)
    out_big, _ = quantization_forward([big, cover], force_tiled=True,
                                      tile_bytes=64 * 1024)
    out_big = jax.block_until_ready(out_big)
    ref_big = jax.block_until_ready(_reference(big))
    assert out_big.shape == big.shape
    assert np.allclose(np.asarray(out_big), np.asarray(ref_big), atol=5e-3, rtol=1e-3)

    # 3) Lane-dense flattened tiled path (size divisible by 1024), multi-block.
    med = jax.random.normal(k4, (2, 4, 64, 64), dtype=jnp.float32)
    out_med, _ = quantization_forward([med, cover], force_tiled=True,
                                      tile_bytes=64 * 1024)
    out_med = jax.block_until_ready(out_med)
    ref_med = jax.block_until_ready(_reference(med))
    assert np.allclose(np.asarray(out_med), np.asarray(ref_med), atol=5e-3, rtol=1e-3)

    print("KERNEL_OK")
</pallas_src>

<mosaic_0001>
module attributes {stable_mosaic.version = 11 : i64} {
  func.func @_fused_kernel(%arg0: memref<2x1024xf32, #tpu.memory_space<vmem>>, %arg1: memref<2x1024xf32, #tpu.memory_space<vmem>>) attributes {dimension_semantics = [], scalar_prefetch = 0 : i64, scratch_operands = 0 : i64, tpu.core_type = #tpu.core_type<tc>} {
    %c0 = arith.constant 0 : index
    %c0_0 = arith.constant 0 : index
    %0 = vector.load %arg0[%c0, %c0_0] : memref<2x1024xf32, #tpu.memory_space<vmem>>, vector<2x1024xf32>
    %1 = vector.shape_cast %0 : vector<2x1024xf32> to vector<1x2x1024xf32>
    %cst = arith.constant dense<0x7F800000> : vector<1xf32>
    %2 = vector.multi_reduction <minimumf>, %1, %cst [1, 2] : vector<1x2x1024xf32> to vector<1xf32>
    %3 = vector.shape_cast %2 : vector<1xf32> to vector<1x1x1xf32>
    %4 = vector.extract %3[0, 0, 0] : f32 from vector<1x1x1xf32>
    %5 = vector.shape_cast %0 : vector<2x1024xf32> to vector<1x2x1024xf32>
    %cst_1 = arith.constant dense<0xFF800000> : vector<1xf32>
    %6 = vector.multi_reduction <maximumf>, %5, %cst_1 [1, 2] : vector<1x2x1024xf32> to vector<1xf32>
    %7 = vector.shape_cast %6 : vector<1xf32> to vector<1x1x1xf32>
    %8 = vector.extract %7[0, 0, 0] : f32 from vector<1x1x1xf32>
    %9 = arith.subf %8, %4 : f32
    %cst_2 = arith.constant 2.550000e+02 : f32
    %10 = arith.divf %cst_2, %9 : f32
    %11 = vector.broadcast %10 : f32 to vector<2x1024xf32>
    %12 = arith.mulf %0, %11 : vector<2x1024xf32>
    %cst_3 = arith.constant 0.000000e+00 : f32
    %13 = arith.subf %cst_3, %4 : f32
    %14 = arith.mulf %13, %10 : f32
    %15 = vector.broadcast %14 : f32 to vector<2x1024xf32>
    %16 = arith.addf %12, %15 : vector<2x1024xf32>
    %cst_4 = arith.constant 0.000000e+00 : f32
    %cst_5 = arith.constant 2.550000e+02 : f32
    %17 = vector.broadcast %cst_4 : f32 to vector<2x1024xf32>
    %18 = arith.maximumf %17, %16 : vector<2x1024xf32>
    %19 = vector.broadcast %cst_5 : f32 to vector<2x1024xf32>
    %20 = arith.minimumf %19, %18 : vector<2x1024xf32>
    %cst_6 = arith.constant 6.28318548 : f32
    %21 = vector.broadcast %cst_6 : f32 to vector<2x1024xf32>
    %22 = arith.mulf %20, %21 : vector<2x1024xf32>
    %23 = math.cos %22 : vector<2x1024xf32>
    %cst_7 = arith.constant 2.000000e+00 : f32
    %24 = vector.broadcast %cst_7 : f32 to vector<2x1024xf32>
    %25 = arith.mulf %24, %23 : vector<2x1024xf32>
    %26 = math.sin %22 : vector<2x1024xf32>
    %cst_8 = arith.constant 0.0318309888 : f32
    %27 = vector.broadcast %cst_8 : f32 to vector<2x1024xf32>
    %28 = arith.mulf %25, %27 : vector<2x1024xf32>
    %cst_9 = arith.constant -0.0353677645 : f32
    %29 = vector.broadcast %cst_9 : f32 to vector<2x1024xf32>
    %30 = arith.addf %29, %28 : vector<2x1024xf32>
    %31 = arith.mulf %25, %30 : vector<2x1024xf32>
    %cst_10 = arith.constant 0.0397887342 : f32
    %32 = vector.broadcast %cst_10 : f32 to vector<2x1024xf32>
    %33 = arith.addf %32, %31 : vector<2x1024xf32>
    %cst_11 = arith.constant 0.0318309888 : f32
    %34 = vector.broadcast %cst_11 : f32 to vector<2x1024xf32>
    %35 = arith.subf %33, %34 : vector<2x1024xf32>
    %36 = arith.mulf %25, %35 : vector<2x1024xf32>
    %cst_12 = arith.constant -0.0454728417 : f32
    %37 = vector.broadcast %cst_12 : f32 to vector<2x1024xf32>
    %38 = arith.addf %37, %36 : vector<2x1024xf32>
    %39 = arith.subf %38, %30 : vector<2x1024xf32>
    %40 = arith.mulf %25, %39 : vector<2x1024xf32>
    %cst_13 = arith.constant 0.0530516468 : f32
    %41 = vector.broadcast %cst_13 : f32 to vector<2x1024xf32>
    %42 = arith.addf %41, %40 : vector<2x1024xf32>
    %43 = arith.subf %42, %35 : vector<2x1024xf32>
    %44 = arith.mulf %25, %43 : vector<2x1024xf32>
    %cst_14 = arith.constant -0.0636619776 : f32
    %45 = vector.broadcast %cst_14 : f32 to vector<2x1024xf32>
    %46 = arith.addf %45, %44 : vector<2x1024xf32>
    %47 = arith.subf %46, %39 : vector<2x1024xf32>
    %48 = arith.mulf %25, %47 : vector<2x1024xf32>
    %cst_15 = arith.constant 0.0795774683 : f32
    %49 = vector.broadcast %cst_15 : f32 to vector<2x1024xf32>
    %50 = arith.addf %49, %48 : vector<2x1024xf32>
    %51 = arith.subf %50, %43 : vector<2x1024xf32>
    %52 = arith.mulf %25, %51 : vector<2x1024xf32>
    %cst_16 = arith.constant -0.106103294 : f32
    %53 = vector.broadcast %cst_16 : f32 to vector<2x1024xf32>
    %54 = arith.addf %53, %52 : vector<2x1024xf32>
    %55 = arith.subf %54, %47 : vector<2x1024xf32>
    %56 = arith.mulf %25, %55 : vector<2x1024xf32>
    %cst_17 = arith.constant 0.159154937 : f32
    %57 = vector.broadcast %cst_17 : f32 to vector<2x1024xf32>
    %58 = arith.addf %57, %56 : vector<2x1024xf32>
    %59 = arith.subf %58, %51 : vector<2x1024xf32>
    %60 = arith.mulf %25, %59 : vector<2x1024xf32>
    %cst_18 = arith.constant -0.318309873 : f32
    %61 = vector.broadcast %cst_18 : f32 to vector<2x1024xf32>
    %62 = arith.addf %61, %60 : vector<2x1024xf32>
    %63 = arith.subf %62, %55 : vector<2x1024xf32>
    %64 = arith.mulf %26, %63 : vector<2x1024xf32>
    %65 = arith.addf %20, %64 : vector<2x1024xf32>
    %66 = vector.shape_cast %65 : vector<2x1024xf32> to vector<1x2x1024xf32>
    %cst_19 = arith.constant dense<0x7F800000> : vector<1xf32>
    %67 = vector.multi_reduction <minimumf>, %66, %cst_19 [1, 2] : vector<1x2x1024xf32> to vector<1xf32>
    %68 = vector.shape_cast %67 : vector<1xf32> to vector<1x1x1xf32>
    %69 = vector.extract %68[0, 0, 0] : f32 from vector<1x1x1xf32>
    %70 = vector.shape_cast %65 : vector<2x1024xf32> to vector<1x2x1024xf32>
    %cst_20 = arith.constant dense<0xFF800000> : vector<1xf32>
    %71 = vector.multi_reduction <maximumf>, %70, %cst_20 [1, 2] : vector<1x2x1024xf32> to vector<1xf32>
    %72 = vector.shape_cast %71 : vector<1xf32> to vector<1x1x1xf32>
    %73 = vector.extract %72[0, 0, 0] : f32 from vector<1x1x1xf32>
    %74 = arith.subf %8, %4 : f32
    %75 = arith.subf %73, %69 : f32
    %76 = arith.divf %74, %75 : f32
    %77 = vector.broadcast %76 : f32 to vector<2x1024xf32>
    %78 = arith.mulf %65, %77 : vector<2x1024xf32>
    %79 = arith.mulf %69, %76 : f32
    %80 = arith.subf %4, %79 : f32
    %81 = vector.broadcast %80 : f32 to vector<2x1024xf32>
    %82 = arith.addf %78, %81 : vector<2x1024xf32>
    %c0_21 = arith.constant 0 : index
    %c0_22 = arith.constant 0 : index
    %83 = vector.load %arg1[%c0_21, %c0_22] : memref<2x1024xf32, #tpu.memory_space<vmem>>, vector<2x1024xf32>
    tpu.vector_store %arg1[%c0_21, %c0_22], %82 {strides = array<i32>} : memref<2x1024xf32, #tpu.memory_space<vmem>>, vector<2x1024xf32>,
    return
  }
}

</mosaic_0001>

<llo_original>
// kernel: _quantize.1
$region0: #{_quantize.1}
  #allocation0 [shape = 'u32[]', space=smem, size = 0x4, offset = 0x4, fixed_abs, tag = 'smem constant byte address 0x4 - core index']
  #allocation1 [shape = 'u32[144,128]{1,0:T(1,128)}', space=vmem, size = 0x12000, scoped, tag = 'internal scratch']
  %s0 = inlined_call_operand.vmem [shape: f32[2,1024], index: 0, kind: input, shape index: {}]
  %s1 = inlined_call_operand.vmem [shape: f32[2,1024], index: 1, kind: output, shape index: {}]
  %s2 = sld [smem:[#allocation0]]
  $region14: #{_quantize.1} parent=0
    _
  %s4 = ssub.s32 1, %s2
  %s5 = scalar_select 0, %s4, %s2
  // Predicated region
  $region2: #{_quantize.1} parent=0 // pred_check
    _
  $region3: #{_quantize.1} parent=0 // pred_check_branch
    %7 = sbr.rel (0) target = $region5
  $region4: #{_quantize.1} parent=0 // pred_region
    _
  $region5: #{_quantize.1} parent=0 // pred_fallthru
    _
  %v8 = vld [vmem:[%s0] sm:$0xff]
  %v9 = vld [vmem:[%s0 + $0x8] sm:$0xff]
  %v12 = vcombine.high %v8, %v8
  %v14 = vunpack.c.l.s4 1983009808
  %v15 = vunpack.c.0.s8 %v14
  %v16 = vlaneseq
  %v17 = vshrl.u32 %v16, 7
  %v18 = vsub.s32 %v15, %v17
  %v19 = vrot.slane %v8, %v18
  %v21 = vunpack.c.l.s4 1983009808
  %v22 = vunpack.c.0.s8 %v21
  %v23 = vlaneseq
  %v24 = vshrl.u32 %v23, 7
  %v25 = vsub.s32 %v22, %v24
  %v26 = vrot.slane %v12, %v25
  %v27 = vcombine.high %v19, %v19
  %v28 = vcombine.high %v26, %v26
  %v29 = vcombine.high %v9, %v9
  %v31 = vunpack.c.l.s4 1983009808
  %v32 = vunpack.c.0.s8 %v31
  %v33 = vlaneseq
  %v34 = vshrl.u32 %v33, 7
  %v35 = vsub.s32 %v32, %v34
  %v36 = vrot.slane %v9, %v35
  %v38 = vunpack.c.l.s4 1983009808
  %v39 = vunpack.c.0.s8 %v38
  %v40 = vlaneseq
  %v41 = vshrl.u32 %v40, 7
  %v42 = vsub.s32 %v39, %v41
  %v43 = vrot.slane %v29, %v42
  %v44 = vcombine.high %v36, %v36
  %v45 = vcombine.high %v43, %v43
  %vm54 = vcmask 1041408
  %v55 = vsel %vm54, %v19, inf
  %v56 = vsel %vm54, %v27, inf
  %v57 = vsel %vm54, %v26, inf
  %v58 = vsel %vm54, %v28, inf
  %v59 = vsel %vm54, %v36, inf
  %v60 = vmin.f32 %v55, %v59
  %v61 = vsel %vm54, %v44, inf
  %v62 = vmin.f32 %v56, %v61
  %v63 = vsel %vm54, %v43, inf
  %v64 = vmin.f32 %v57, %v63
  %v65 = vsel %vm54, %v45, inf
  %v66 = vmin.f32 %v58, %v65
  %v67 = vmin.f32 %v60, %v62
  %v68 = vmin.f32 %v64, %v66
  %v69 = vmin.f32 %v67, %v68
  %70 = vmin.xlane.f32.xlu0 %v69
  %v71 = vpop.xlane.xlu0 %70
  %v72 = vrot.slane %v71, 4
  %v73 = vmin.f32 %v71, %v72
  %v74 = vrot.slane %v73, 2
  %v75 = vmin.f32 %v73, %v74
  %v76 = vrot.slane %v75, 1
  %v77 = vmin.f32 %v75, %v76
  %s78 = vtos %v77
  %v79 = vsel %vm54, %v19, -inf
  %v80 = vsel %vm54, %v27, -inf
  %v81 = vsel %vm54, %v26, -inf
  %v82 = vsel %vm54, %v28, -inf
  %v83 = vsel %vm54, %v36, -inf
  %v84 = vmax.f32 %v79, %v83
  %v85 = vsel %vm54, %v44, -inf
  %v86 = vmax.f32 %v80, %v85
  %v87 = vsel %vm54, %v43, -inf
  %v88 = vmax.f32 %v81, %v87
  %v89 = vsel %vm54, %v45, -inf
  %v90 = vmax.f32 %v82, %v89
  %v91 = vmax.f32 %v84, %v86
  %v92 = vmax.f32 %v88, %v90
  %v93 = vmax.f32 %v91, %v92
  %94 = vmax.xlane.f32.xlu0 %v93
  %v95 = vpop.xlane.xlu0 %94
  %v96 = vrot.slane %v95, 4
  %v97 = vmax.f32 %v95, %v96
  %v98 = vrot.slane %v97, 2
  %v99 = vmax.f32 %v97, %v98
  %v100 = vrot.slane %v99, 1
  %v101 = vmax.f32 %v99, %v100
  %s102 = vtos %v101
  %s103 = ssub.f32 %s102, %s78
  %v104 = vstv %s103
  %v105 = vrcp.pop %v104
  %s106 = vtos %v105
  %s107 = smul.f32 255.0, %s106
  %v108 = vstv %s107
  %v109 = vmul.f32 %v8, %v108
  %v110 = vmul.f32 %v9, %v108
  %s111 = ssub.f32 0.0, %s78
  %s112 = smul.f32 %s111, %s107
  %v113 = vstv %s112
  %v114 = vadd.f32 %v109, %v113
  %v115 = vadd.f32 %v110, %v113
  %v116 = vmax.f32 %v114, 0.0
  %v117 = vmax.f32 %v115, 0.0
  %v118 = vmin.f32 %v116, 255.0
  %v119 = vmin.f32 %v117, 255.0
  %v120 = vmul.f32 %v118, 6.2831855
  %v121 = vmul.f32 %v119, 6.2831855
  %v122 = vand.u32 2147483647, %v120
  %vm123 = vcmp.le.f32.partialorder %v122, 0.7853982
  %vm124 = vcmp.lt.s32.totalorder %v120, 0
  %v125 = vand.u32 %v120, 2139095040
  %v126 = vshrl.u32 %v125, 23
  %v127 = vsub.s32 %v126, 127
  %v128 = vand.u32 2147483647, %v120
  %v129 = vand.u32 %v128, 8388607
  %v130 = vor.u32 %v129, 8388608
  %v131 = vsub.s32 0, %v130
  %v132 = vadd.s32 %v127, 1
  %vm133 = vcmp.gt.s32.totalorder %v132, 0
  %v134 = vsel %vm133, %v132, 0
  %v135 = vshrl.u32 %v134, 5
  %v136 = vand.u32 %v134, 31
  %v137 = vsub.s32 32, %v136
  %v138 = vshrl.u32 683565275, %v137
  %v139 = vshll.u32 683565275, %v136
  %v140 = vshrl.u32 2475754826, %v137
  %v141 = vor.u32 %v139, %v140
  %v142 = vshll.u32 2475754826, %v136
  %v143 = vshrl.u32 2131351028, %v137
  %v144 = vor.u32 %v142, %v143
  %v145 = vshll.u32 2131351028, %v136
  %v146 = vshrl.u32 2102212464, %v137
  %v147 = vor.u32 %v145, %v146
  %v148 = vshll.u32 2102212464, %v136
  %v149 = vshrl.u32 920167782, %v137
  %v150 = vor.u32 %v148, %v149
  %v151 = vshll.u32 920167782, %v136
  %v152 = vshrl.u32 1326507024, %v137
  %v153 = vor.u32 %v151, %v152
  %vm154 = vcmp.lt.s32.totalorder %v135, 1
  %vm155 = vcmp.lt.s32.totalorder %v135, 2
  %vm156 = vcmp.lt.s32.totalorder %v135, 3
  %vm157 = vcmp.lt.s32.totalorder %v135, 4
  %v158 = vsel %vm154, %v138, %v141
  %v159 = vsel %vm157, %v147, 2102212464
  %v160 = vsel %vm156, %v144, %v159
  %v161 = vsel %vm155, %v158, %v160
  %v162 = vsel %vm154, %v141, %v144
  %v163 = vsel %vm157, %v150, 920167782
  %v164 = vsel %vm156, %v147, %v163
  %v165 = vsel %vm155, %v162, %v164
  %v166 = vsel %vm154, %v144, %v147
  %v167 = vsel %vm157, %v153, 1326507024
  %v168 = vsel %vm156, %v150, %v167
  %v169 = vsel %vm155, %v166, %v168
  %v170 = vshll.u32 %v130, 8
  %v171 = vmul.u32.u64.compose %v170, %v169
  %v172 = vextract.low.u32 %v171
  %v173 = vextract.high.u32 %v171
  %v174 = vmul.u32.u64.compose %v170, %v165
  %v175 = vextract.low.u32 %v174
  %v176 = vextract.high.u32 %v174
  %v177 = vmul.u32 %v170, %v161
  %v178 = vadd.s32 %v173, %v175
  %vm179 = vc.u32 %v173, %v175
  %v180 = vadd.s32 %v176, 1
  %v181 = vsel %vm179, %v180, %v176
  %v182 = vadd.s32 %v177, %v181
  %v183 = vadd.s32 %v182, 536870912
  %v184 = vshrl.u32 %v183, 30
  %v185 = vshll.u32 %v184, 30
  %v186 = vsub.s32 %v182, %v185
  %vm187 = vcmp.lt.s32.totalorder %v186, 0
  %v188 = vsub.s32 0, %v186
  %v189 = vsel %vm187, %v188, %v186
  %v190 = vclz %v189
  %v191 = vsub.s32 %v190, 2
  %vm192 = vcmp.gt.s32.totalorder 0, %v191
  %v193 = vsel %vm192, 0, %v191
  %v194 = vsub.s32 32, %v193
  %v195 = vshll.u32 %v186, %v193
  %v196 = vshrl.u32 %v178, %v194
  %v197 = vor.u32 %v195, %v196
  %v198 = vsub.s32 4294967266, %v193
  %v199 = vadd.s32 %v198, 127
  %v200 = vshll.u32 %v199, 23
  %v201 = vor.u32 4788187, %v200
  %v202 = vand.u32 2147483647, %v201
  %v204 = vcvt.s32.f32 %v197
  %v205 = vmul.f32 %v204, %v202
  %v206 = vxor.u32 %v205, 2147483648
  %v207 = vsel %vm124, %v206, %v205
  %v208 = vsub.s32 4, %v184
  %v209 = vsel %vm124, %v208, %v184
  %v210 = vsel %vm123, %v120, %v207
  %v211 = vsel %vm123, 0, %v209
  %v212 = vcosq.f32.pop %v210
  %v213 = vsinq.f32.pop %v210
  %vm214 = vweird.f32 %v120
  %v215 = vand.u32 %v211, 3
  %vm216 = vcmp.lt.s32.totalorder %v215, 2
  %vm217 = vcmp.eq.s32.totalorder %v215, 0
  %v218 = vxor.u32 %v213, 2147483648
  %v219 = vsel %vm217, %v212, %v218
  %vm220 = vcmp.eq.s32.totalorder %v215, 2
  %v221 = vxor.u32 %v212, 2147483648
  %v222 = vsel %vm220, %v221, %v213
  %v223 = vsel %vm216, %v219, %v222
  %v224 = vsel %vm214, nan, %v223
  %v225 = vand.u32 2147483647, %v121
  %vm226 = vcmp.le.f32.partialorder %v225, 0.7853982
  %vm227 = vcmp.lt.s32.totalorder %v121, 0
  %v228 = vand.u32 %v121, 2139095040
  %v229 = vshrl.u32 %v228, 23
  %v230 = vsub.s32 %v229, 127
  %v231 = vand.u32 2147483647, %v121
  %v232 = vand.u32 %v231, 8388607
  %v233 = vor.u32 %v232, 8388608
  %v234 = vsub.s32 0, %v233
  %v235 = vadd.s32 %v230, 1
  %vm236 = vcmp.gt.s32.totalorder %v235, 0
  %v237 = vsel %vm236, %v235, 0
  %v238 = vshrl.u32 %v237, 5
  %v239 = vand.u32 %v237, 31
  %v240 = vsub.s32 32, %v239
  %v241 = vshrl.u32 683565275, %v240
  %v242 = vshll.u32 683565275, %v239
  %v243 = vshrl.u32 2475754826, %v240
  %v244 = vor.u32 %v242, %v243
  %v245 = vshll.u32 2475754826, %v239
  %v246 = vshrl.u32 2131351028, %v240
  %v247 = vor.u32 %v245, %v246
  %v248 = vshll.u32 2131351028, %v239
  %v249 = vshrl.u32 2102212464, %v240
  %v250 = vor.u32 %v248, %v249
  %v251 = vshll.u32 2102212464, %v239
  %v252 = vshrl.u32 920167782, %v240
  %v253 = vor.u32 %v251, %v252
  %v254 = vshll.u32 920167782, %v239
  %v255 = vshrl.u32 1326507024, %v240
  %v256 = vor.u32 %v254, %v255
  %vm257 = vcmp.lt.s32.totalorder %v238, 1
  %vm258 = vcmp.lt.s32.totalorder %v238, 2
  %vm259 = vcmp.lt.s32.totalorder %v238, 3
  %vm260 = vcmp.lt.s32.totalorder %v238, 4
  %v261 = vsel %vm257, %v241, %v244
  %v262 = vsel %vm260, %v250, 2102212464
  %v263 = vsel %vm259, %v247, %v262
  %v264 = vsel %vm258, %v261, %v263
  %v265 = vsel %vm257, %v244, %v247
  %v266 = vsel %vm260, %v253, 920167782
  %v267 = vsel %vm259, %v250, %v266
  %v268 = vsel %vm258, %v265, %v267
  %v269 = vsel %vm257, %v247, %v250
  %v270 = vsel %vm260, %v256, 1326507024
  %v271 = vsel %vm259, %v253, %v270
  %v272 = vsel %vm258, %v269, %v271
  %v273 = vshll.u32 %v233, 8
  %v274 = vmul.u32.u64.compose %v273, %v272
  %v275 = vextract.low.u32 %v274
  %v276 = vextract.high.u32 %v274
  %v277 = vmul.u32.u64.compose %v273, %v268
  %v278 = vextract.low.u32 %v277
  %v279 = vextract.high.u32 %v277
  %v280 = vmul.u32 %v273, %v264
  %v281 = vadd.s32 %v276, %v278
  %vm282 = vc.u32 %v276, %v278
  %v283 = vadd.s32 %v279, 1
  %v284 = vsel %vm282, %v283, %v279
  %v285 = vadd.s32 %v280, %v284
  %v286 = vadd.s32 %v285, 536870912
  %v287 = vshrl.u32 %v286, 30
  %v288 = vshll.u32 %v287, 30
  %v289 = vsub.s32 %v285, %v288
  %vm290 = vcmp.lt.s32.totalorder %v289, 0
  %v291 = vsub.s32 0, %v289
  %v292 = vsel %vm290, %v291, %v289
  %v293 = vclz %v292
  %v294 = vsub.s32 %v293, 2
  %vm295 = vcmp.gt.s32.totalorder 0, %v294
  %v296 = vsel %vm295, 0, %v294
  %v297 = vsub.s32 32, %v296
  %v298 = vshll.u32 %v289, %v296
  %v299 = vshrl.u32 %v281, %v297
  %v300 = vor.u32 %v298, %v299
  %v301 = vsub.s32 4294967266, %v296
  %v302 = vadd.s32 %v301, 127
  %v303 = vshll.u32 %v302, 23
  %v304 = vor.u32 4788187, %v303
  %v305 = vand.u32 2147483647, %v304
  %v307 = vcvt.s32.f32 %v300
  %v308 = vmul.f32 %v307, %v305
  %v309 = vxor.u32 %v308, 2147483648
  %v310 = vsel %vm227, %v309, %v308
  %v311 = vsub.s32 4, %v287
  %v312 = vsel %vm227, %v311, %v287
  %v313 = vsel %vm226, %v121, %v310
  %v314 = vsel %vm226, 0, %v312
  %v315 = vcosq.f32.pop %v313
  %v316 = vsinq.f32.pop %v313
  %vm317 = vweird.f32 %v121
  %v318 = vand.u32 %v314, 3
  %vm319 = vcmp.lt.s32.totalorder %v318, 2
  %vm320 = vcmp.eq.s32.totalorder %v318, 0
  %v321 = vxor.u32 %v316, 2147483648
  %v322 = vsel %vm320, %v315, %v321
  %vm323 = vcmp.eq.s32.totalorder %v318, 2
  %v324 = vxor.u32 %v315, 2147483648
  %v325 = vsel %vm323, %v324, %v316
  %v326 = vsel %vm319, %v322, %v325
  %v327 = vsel %vm317, nan, %v326
  %v328 = vmul.f32 %v224, 2.0
  %v329 = vmul.f32 %v327, 2.0
  %v330 = vand.u32 2147483647, %v120
  %vm331 = vcmp.le.f32.partialorder %v330, 0.7853982
  %vm332 = vcmp.lt.s32.totalorder %v120, 0
  %v333 = vand.u32 %v120, 2139095040
  %v334 = vshrl.u32 %v333, 23
  %v335 = vsub.s32 %v334, 127
  %v336 = vand.u32 2147483647, %v120
  %v337 = vand.u32 %v336, 8388607
  %v338 = vor.u32 %v337, 8388608
  %v339 = vsub.s32 0, %v338
  %v340 = vadd.s32 %v335, 1
  %vm341 = vcmp.gt.s32.totalorder %v340, 0
  %v342 = vsel %vm341, %v340, 0
  %v343 = vshrl.u32 %v342, 5
  %v344 = vand.u32 %v342, 31
  %v345 = vsub.s32 32, %v344
  %v346 = vshrl.u32 683565275, %v345
  %v347 = vshll.u32 683565275, %v344
  %v348 = vshrl.u32 2475754826, %v345
  %v349 = vor.u32 %v347, %v348
  %v350 = vshll.u32 2475754826, %v344
  %v351 = vshrl.u32 2131351028, %v345
  %v352 = vor.u32 %v350, %v351
  %v353 = vshll.u32 2131351028, %v344
  %v354 = vshrl.u32 2102212464, %v345
  %v355 = vor.u32 %v353, %v354
  %v356 = vshll.u32 2102212464, %v344
  %v357 = vshrl.u32 920167782, %v345
  %v358 = vor.u32 %v356, %v357
  %v359 = vshll.u32 920167782, %v344
  %v360 = vshrl.u32 1326507024, %v345
  %v361 = vor.u32 %v359, %v360
  %vm362 = vcmp.lt.s32.totalorder %v343, 1
  %vm363 = vcmp.lt.s32.totalorder %v343, 2
  %vm364 = vcmp.lt.s32.totalorder %v343, 3
  %vm365 = vcmp.lt.s32.totalorder %v343, 4
  %v366 = vsel %vm362, %v346, %v349
  %v367 = vsel %vm365, %v355, 2102212464
  %v368 = vsel %vm364, %v352, %v367
  %v369 = vsel %vm363, %v366, %v368
  %v370 = vsel %vm362, %v349, %v352
  %v371 = vsel %vm365, %v358, 920167782
  %v372 = vsel %vm364, %v355, %v371
  %v373 = vsel %vm363, %v370, %v372
  %v374 = vsel %vm362, %v352, %v355
  %v375 = vsel %vm365, %v361, 1326507024
  %v376 = vsel %vm364, %v358, %v375
  %v377 = vsel %vm363, %v374, %v376
  %v378 = vshll.u32 %v338, 8
  %v379 = vmul.u32.u64.compose %v378, %v377
  %v380 = vextract.low.u32 %v379
  %v381 = vextract.high.u32 %v379
  %v382 = vmul.u32.u64.compose %v378, %v373
  %v383 = vextract.low.u32 %v382
  %v384 = vextract.high.u32 %v382
  %v385 = vmul.u32 %v378, %v369
  %v386 = vadd.s32 %v381, %v383
  %vm387 = vc.u32 %v381, %v383
  %v388 = vadd.s32 %v384, 1
  %v389 = vsel %vm387, %v388, %v384
  %v390 = vadd.s32 %v385, %v389
  %v391 = vadd.s32 %v390, 536870912
  %v392 = vshrl.u32 %v391, 30
  %v393 = vshll.u32 %v392, 30
  %v394 = vsub.s32 %v390, %v393
  %vm395 = vcmp.lt.s32.totalorder %v394, 0
  %v396 = vsub.s32 0, %v394
  %v397 = vsel %vm395, %v396, %v394
  %v398 = vclz %v397
  %v399 = vsub.s32 %v398, 2
  %vm400 = vcmp.gt.s32.totalorder 0, %v399
  %v401 = vsel %vm400, 0, %v399
  %v402 = vsub.s32 32, %v401
  %v403 = vshll.u32 %v394, %v401
  %v404 = vshrl.u32 %v386, %v402
  %v405 = vor.u32 %v403, %v404
  %v406 = vsub.s32 4294967266, %v401
  %v407 = vadd.s32 %v406, 127
  %v408 = vshll.u32 %v407, 23
  %v409 = vor.u32 4788187, %v408
  %v410 = vand.u32 2147483647, %v409
  %v412 = vcvt.s32.f32 %v405
  %v413 = vmul.f32 %v412, %v410
  %v414 = vxor.u32 %v413, 2147483648
  %v415 = vsel %vm332, %v414, %v413
  %v416 = vsub.s32 4, %v392
  %v417 = vsel %vm332, %v416, %v392
  %v418 = vsel %vm331, %v120, %v415
  %v419 = vsel %vm331, 0, %v417
  %v420 = vcosq.f32.pop %v418
  %v421 = vsinq.f32.pop %v418
  %vm422 = vweird.f32 %v120
  %v423 = vadd.s32 %v419, 3
  %v424 = vand.u32 %v423, 3
  %vm425 = vcmp.lt.s32.totalorder %v424, 2
  %vm426 = vcmp.eq.s32.totalorder %v424, 0
  %v427 = vxor.u32 %v421, 2147483648
  %v428 = vsel %vm426, %v420, %v427
  %vm429 = vcmp.eq.s32.totalorder %v424, 2
  %v430 = vxor.u32 %v420, 2147483648
  %v431 = vsel %vm429, %v430, %v421
  %v432 = vsel %vm425, %v428, %v431
  %v433 = vsel %vm422, nan, %v432
  %v434 = vand.u32 2147483647, %v121
  %vm435 = vcmp.le.f32.partialorder %v434, 0.7853982
  %vm436 = vcmp.lt.s32.totalorder %v121, 0
  %v437 = vand.u32 %v121, 2139095040
  %v438 = vshrl.u32 %v437, 23
  %v439 = vsub.s32 %v438, 127
  %v440 = vand.u32 2147483647, %v121
  %v441 = vand.u32 %v440, 8388607
  %v442 = vor.u32 %v441, 8388608
  %v443 = vsub.s32 0, %v442
  %v444 = vadd.s32 %v439, 1
  %vm445 = vcmp.gt.s32.totalorder %v444, 0
  %v446 = vsel %vm445, %v444, 0
  %v447 = vshrl.u32 %v446, 5
  %v448 = vand.u32 %v446, 31
  %v449 = vsub.s32 32, %v448
  %v450 = vshrl.u32 683565275, %v449
  %v451 = vshll.u32 683565275, %v448
  %v452 = vshrl.u32 2475754826, %v449
  %v453 = vor.u32 %v451, %v452
  %v454 = vshll.u32 2475754826, %v448
  %v455 = vshrl.u32 2131351028, %v449
  %v456 = vor.u32 %v454, %v455
  %v457 = vshll.u32 2131351028, %v448
  %v458 = vshrl.u32 2102212464, %v449
  %v459 = vor.u32 %v457, %v458
  %v460 = vshll.u32 2102212464, %v448
  %v461 = vshrl.u32 920167782, %v449
  %v462 = vor.u32 %v460, %v461
  %v463 = vshll.u32 920167782, %v448
  %v464 = vshrl.u32 1326507024, %v449
  %v465 = vor.u32 %v463, %v464
  %vm466 = vcmp.lt.s32.totalorder %v447, 1
  %vm467 = vcmp.lt.s32.totalorder %v447, 2
  %vm468 = vcmp.lt.s32.totalorder %v447, 3
  %vm469 = vcmp.lt.s32.totalorder %v447, 4
  %v470 = vsel %vm466, %v450, %v453
  %v471 = vsel %vm469, %v459, 2102212464
  %v472 = vsel %vm468, %v456, %v471
  %v473 = vsel %vm467, %v470, %v472
  %v474 = vsel %vm466, %v453, %v456
  %v475 = vsel %vm469, %v462, 920167782
  %v476 = vsel %vm468, %v459, %v475
  %v477 = vsel %vm467, %v474, %v476
  %v478 = vsel %vm466, %v456, %v459
  %v479 = vsel %vm469, %v465, 1326507024
  %v480 = vsel %vm468, %v462, %v479
  %v481 = vsel %vm467, %v478, %v480
  %v482 = vshll.u32 %v442, 8
  %v483 = vmul.u32.u64.compose %v482, %v481
  %v484 = vextract.low.u32 %v483
  %v485 = vextract.high.u32 %v483
  %v486 = vmul.u32.u64.compose %v482, %v477
  %v487 = vextract.low.u32 %v486
  %v488 = vextract.high.u32 %v486
  %v489 = vmul.u32 %v482, %v473
  %v490 = vadd.s32 %v485, %v487
  %vm491 = vc.u32 %v485, %v487
  %v492 = vadd.s32 %v488, 1
  %v493 = vsel %vm491, %v492, %v488
  %v494 = vadd.s32 %v489, %v493
  %v495 = vadd.s32 %v494, 536870912
  %v496 = vshrl.u32 %v495, 30
  %v497 = vshll.u32 %v496, 30
  %v498 = vsub.s32 %v494, %v497
  %vm499 = vcmp.lt.s32.totalorder %v498, 0
  %v500 = vsub.s32 0, %v498
  %v501 = vsel %vm499, %v500, %v498
  %v502 = vclz %v501
  %v503 = vsub.s32 %v502, 2
  %vm504 = vcmp.gt.s32.totalorder 0, %v503
  %v505 = vsel %vm504, 0, %v503
  %v506 = vsub.s32 32, %v505
  %v507 = vshll.u32 %v498, %v505
  %v508 = vshrl.u32 %v490, %v506
  %v509 = vor.u32 %v507, %v508
  %v510 = vsub.s32 4294967266, %v505
  %v511 = vadd.s32 %v510, 127
  %v512 = vshll.u32 %v511, 23
  %v513 = vor.u32 4788187, %v512
  %v514 = vand.u32 2147483647, %v513
  %v516 = vcvt.s32.f32 %v509
  %v517 = vmul.f32 %v516, %v514
  %v518 = vxor.u32 %v517, 2147483648
  %v519 = vsel %vm436, %v518, %v517
  %v520 = vsub.s32 4, %v496
  %v521 = vsel %vm436, %v520, %v496
  %v522 = vsel %vm435, %v121, %v519
  %v523 = vsel %vm435, 0, %v521
  %v524 = vcosq.f32.pop %v522
  %v525 = vsinq.f32.pop %v522
  %vm526 = vweird.f32 %v121
  %v527 = vadd.s32 %v523, 3
  %v528 = vand.u32 %v527, 3
  %vm529 = vcmp.lt.s32.totalorder %v528, 2
  %vm530 = vcmp.eq.s32.totalorder %v528, 0
  %v531 = vxor.u32 %v525, 2147483648
  %v532 = vsel %vm530, %v524, %v531
  %vm533 = vcmp.eq.s32.totalorder %v528, 2
  %v534 = vxor.u32 %v524, 2147483648
  %v535 = vsel %vm533, %v534, %v525
  %v536 = vsel %vm529, %v532, %v535
  %v537 = vsel %vm526, nan, %v536
  %v538 = vmul.f32 %v328, 0.03183099
  %v539 = vmul.f32 %v329, 0.03183099
  %v540 = vadd.f32 %v538, -0.035367765
  %v541 = vadd.f32 %v539, -0.035367765
  %v542 = vmul.f32 %v328, %v540
  %v543 = vmul.f32 %v329, %v541
  %v544 = vadd.f32 %v542, 0.039788734
  %v545 = vadd.f32 %v543, 0.039788734
  %v546 = vsub.f32 %v544, 0.03183099
  %v547 = vsub.f32 %v545, 0.03183099
  %v548 = vmul.f32 %v328, %v546
  %v549 = vmul.f32 %v329, %v547
  %v550 = vadd.f32 %v548, -0.04547284
  %v551 = vadd.f32 %v549, -0.04547284
  %v552 = vsub.f32 %v550, %v540
  %v553 = vsub.f32 %v551, %v541
  %v554 = vmul.f32 %v328, %v552
  %v555 = vmul.f32 %v329, %v553
  %v556 = vadd.f32 %v554, 0.053051647
  %v557 = vadd.f32 %v555, 0.053051647
  %v558 = vsub.f32 %v556, %v546
  %v559 = vsub.f32 %v557, %v547
  %v560 = vmul.f32 %v328, %v558
  %v561 = vmul.f32 %v329, %v559
  %v562 = vadd.f32 %v560, -0.06366198
  %v563 = vadd.f32 %v561, -0.06366198
  %v564 = vsub.f32 %v562, %v552
  %v565 = vsub.f32 %v563, %v553
  %v566 = vmul.f32 %v328, %v564
  %v567 = vmul.f32 %v329, %v565
  %v568 = vadd.f32 %v566, 0.07957747
  %v569 = vadd.f32 %v567, 0.07957747
  %v570 = vsub.f32 %v568, %v558
  %v571 = vsub.f32 %v569, %v559
  %v572 = vmul.f32 %v328, %v570
  %v573 = vmul.f32 %v329, %v571
  %v574 = vadd.f32 %v572, -0.10610329
  %v575 = vadd.f32 %v573, -0.10610329
  %v576 = vsub.f32 %v574, %v564
  %v577 = vsub.f32 %v575, %v565
  %v578 = vmul.f32 %v328, %v576
  %v579 = vmul.f32 %v329, %v577
  %v580 = vadd.f32 %v578, 0.15915494
  %v581 = vadd.f32 %v579, 0.15915494
  %v582 = vsub.f32 %v580, %v570
  %v583 = vsub.f32 %v581, %v571
  %v584 = vmul.f32 %v328, %v582
  %v585 = vmul.f32 %v329, %v583
  %v586 = vadd.f32 %v584, -0.31830987
  %v587 = vadd.f32 %v585, -0.31830987
  %v588 = vsub.f32 %v586, %v576
  %v589 = vsub.f32 %v587, %v577
  %v590 = vmul.f32 %v433, %v588
  %v591 = vmul.f32 %v537, %v589
  %v592 = vadd.f32 %v118, %v590
  %v593 = vadd.f32 %v119, %v591
  %v596 = vcombine.high %v592, %v592
  %v598 = vunpack.c.l.s4 1983009808
  %v599 = vunpack.c.0.s8 %v598
  %v600 = vlaneseq
  %v601 = vshrl.u32 %v600, 7
  %v602 = vsub.s32 %v599, %v601
  %v603 = vrot.slane %v592, %v602
  %v605 = vunpack.c.l.s4 1983009808
  %v606 = vunpack.c.0.s8 %v605
  %v607 = vlaneseq
  %v608 = vshrl.u32 %v607, 7
  %v609 = vsub.s32 %v606, %v608
  %v610 = vrot.slane %v596, %v609
  %v611 = vcombine.high %v603, %v603
  %v612 = vcombine.high %v610, %v610
  %v613 = vcombine.high %v593, %v593
  %v615 = vunpack.c.l.s4 1983009808
  %v616 = vunpack.c.0.s8 %v615
  %v617 = vlaneseq
  %v618 = vshrl.u32 %v617, 7
  %v619 = vsub.s32 %v616, %v618
  %v620 = vrot.slane %v593, %v619
  %v622 = vunpack.c.l.s4 1983009808
  %v623 = vunpack.c.0.s8 %v622
  %v624 = vlaneseq
  %v625 = vshrl.u32 %v624, 7
  %v626 = vsub.s32 %v623, %v625
  %v627 = vrot.slane %v613, %v626
  %v628 = vcombine.high %v620, %v620
  %v629 = vcombine.high %v627, %v627
  %v638 = vsel %vm54, %v603, inf
  %v639 = vsel %vm54, %v611, inf
  %v640 = vsel %vm54, %v610, inf
  %v641 = vsel %vm54, %v612, inf
  %v642 = vsel %vm54, %v620, inf
  %v643 = vmin.f32 %v638, %v642
  %v644 = vsel %vm54, %v628, inf
  %v645 = vmin.f32 %v639, %v644
  %v646 = vsel %vm54, %v627, inf
  %v647 = vmin.f32 %v640, %v646
  %v648 = vsel %vm54, %v629, inf
  %v649 = vmin.f32 %v641, %v648
  %v650 = vmin.f32 %v643, %v645
  %v651 = vmin.f32 %v647, %v649
  %v652 = vmin.f32 %v650, %v651
  %653 = vmin.xlane.f32.xlu0 %v652
  %v654 = vpop.xlane.xlu0 %653
  %v655 = vrot.slane %v654, 4
  %v656 = vmin.f32 %v654, %v655
  %v657 = vrot.slane %v656, 2
  %v658 = vmin.f32 %v656, %v657
  %v659 = vrot.slane %v658, 1
  %v660 = vmin.f32 %v658, %v659
  %s661 = vtos %v660
  %v662 = vsel %vm54, %v603, -inf
  %v663 = vsel %vm54, %v611, -inf
  %v664 = vsel %vm54, %v610, -inf
  %v665 = vsel %vm54, %v612, -inf
  %v666 = vsel %vm54, %v620, -inf
  %v667 = vmax.f32 %v662, %v666
  %v668 = vsel %vm54, %v628, -inf
  %v669 = vmax.f32 %v663, %v668
  %v670 = vsel %vm54, %v627, -inf
  %v671 = vmax.f32 %v664, %v670
  %v672 = vsel %vm54, %v629, -inf
  %v673 = vmax.f32 %v665, %v672
  %v674 = vmax.f32 %v667, %v669
  %v675 = vmax.f32 %v671, %v673
  %v676 = vmax.f32 %v674, %v675
  %677 = vmax.xlane.f32.xlu0 %v676
  %v678 = vpop.xlane.xlu0 %677
  %v679 = vrot.slane %v678, 4
  %v680 = vmax.f32 %v678, %v679
  %v681 = vrot.slane %v680, 2
  %v682 = vmax.f32 %v680, %v681
  %v683 = vrot.slane %v682, 1
  %v684 = vmax.f32 %v682, %v683
  %s685 = vtos %v684
  %s686 = ssub.f32 %s685, %s661
  %v687 = vstv %s686
  %v688 = vrcp.pop %v687
  %s689 = vtos %v688
  %s690 = smul.f32 %s103, %s689
  %v691 = vstv %s690
  %v692 = vmul.f32 %v592, %v691
  %v693 = vmul.f32 %v593, %v691
  %s694 = smul.f32 %s661, %s690
  %s695 = ssub.f32 %s78, %s694
  %v696 = vstv %s695
  %v697 = vadd.f32 %v692, %v696
  %v698 = vadd.f32 %v693, %v696
  %699 = vst [vmem:[%s1] sm:$0xff] %v697
  %700 = vst [vmem:[%s1 + $0x8] sm:$0xff] %v698
  // Predicated region
  $region6: #{_quantize.1} parent=0 // pred_check
    _
  $region7: #{_quantize.1} parent=0 // pred_check_branch
    %702 = sbr.rel (0) target = $region9
  $region8: #{_quantize.1} parent=0 // pred_region
    _
  $region9: #{_quantize.1} parent=0 // pred_fallthru
    _
  // Predicated region
  $region10: #{_quantize.1} parent=0 // pred_check
    _
  $region11: #{_quantize.1} parent=0 // pred_check_branch
    %704 = sbr.rel (0) target = $region13
  $region12: #{_quantize.1} parent=0 // pred_region
    _
  $region13: #{_quantize.1} parent=0 // pred_fallthru
    _

</llo_original>
